<compile_context>
chip_gen: v7x
topology: tpu7x:2x2x1
jax: 0.10.0
libtpu: 0.0.40
codegen_flags: <defaults>
</compile_context>

<pallas_src>
import functools

import jax
import jax.numpy as jnp
from jax.experimental import pallas as pl
from jax.experimental.pallas import tpu as pltpu

_LANE = 128
_SOFT_BLOCK_BUDGET = 4 * 1024 * 1024   # per input block (Pallas double-buffers it)
_HARD_BLOCK_CAP = 8 * 1024 * 1024      # never pick a ragged layout whose minimal block exceeds this


def _pick_sublane_tile(R, K, lanes, itemsize):
    """Largest sublane tile TM that divides R, is packing-aligned (or == R), and
    keeps the (K, TM, lanes) input block under the soft VMEM budget."""
    sub_align = max(1, (8 * 4) // itemsize)  # 8 for f32, 16 for bf16, 32 for int8
    max_tm = max(1, _SOFT_BLOCK_BUDGET // (K * lanes * itemsize))
    candidates = [R] + [t for t in range(sub_align, R + 1, sub_align) if R % t == 0]
    fitting = [t for t in candidates if t <= max_tm]
    if fitting:
        return max(fitting)
    return min(candidates)  # nothing under the soft budget: smallest legal tile


def _choose_layout(C, H, W, K, itemsize):
    """Pick (R, lanes, TM) for the fused C*H*W axis."""
    CHW = C * H * W
    if CHW % _LANE == 0:
        R, lanes = CHW // _LANE, _LANE
        return R, lanes, _pick_sublane_tile(R, K, lanes, itemsize)
    # Ragged fallback: full-extent last dim (always legal).  Prefer the widest
    # one (H*W) for denser lanes, as long as its minimal block fits VMEM.
    # TODO(synk): pad-to-128 path for ragged CHW would give fully unmasked stores.
    for R, lanes in ((C, H * W), (C * H, W)):
        tm = _pick_sublane_tile(R, K, lanes, itemsize)
        if K * tm * lanes * itemsize <= _HARD_BLOCK_CAP:
            return R, lanes, tm
    R, lanes = C * H, W
    return R, lanes, _pick_sublane_tile(R, K, lanes, itemsize)


def _mean_over_k_kernel(x_ref, o_ref, *, inv_k):
    # x_ref: (K, TM, lanes); o_ref: (TM, lanes).  Sum over K in f32 on the VPU.
    acc = jnp.sum(x_ref[...].astype(jnp.float32), axis=0)
    o_ref[...] = (acc * inv_k).astype(o_ref.dtype)


def temporal_aggregation_mean(s, K):
    """s: (B*K, C, H, W) -> (B, C, H, W), mean over the K temporal frames."""
    N, C, H, W = s.shape
    assert N % K == 0, "batch dim must be divisible by K"
    B = N // K
    itemsize = jnp.dtype(s.dtype).itemsize

    R, lanes, TM = _choose_layout(C, H, W, K, itemsize)
    assert R % TM == 0

    x = s.reshape(B, K, R, lanes)  # row-major refold, no data shuffle
    grid = (B, R // TM)

    kernel = functools.partial(_mean_over_k_kernel, inv_k=1.0 / K)

    out = pl.pallas_call(
        kernel,
        out_shape=jax.ShapeDtypeStruct((B, R, lanes), s.dtype),
        grid_spec=pltpu.PrefetchScalarGridSpec(
            num_scalar_prefetch=0,
            grid=grid,
            in_specs=[
                pl.BlockSpec(
                    (pl.Squeezed(), K, TM, lanes),
                    lambda b, m: (b, 0, m, 0),
                )
            ],
            out_specs=pl.BlockSpec(
                (pl.Squeezed(), TM, lanes),
                lambda b, m: (b, m, 0),
            ),
        ),
        compiler_params=pltpu.CompilerParams(
            dimension_semantics=("parallel", "parallel"),
            vmem_limit_bytes=48 * 1024 * 1024,
        ),
    )(x)

    return out.reshape(B, C, H, W)


if __name__ == "__main__":
    # Module has no learnable parameters (only cfg.K), so nothing to initialize.
    K = 4
    B = 2          # number of temporal groups
    C, H, W = 4, 16, 16
    N = B * K      # PyTorch input batch dim is B*K

    key = jax.random.PRNGKey(0)
    s = jax.random.normal(key, (N, C, H, W), dtype=jnp.float32)

    out = temporal_aggregation_mean(s, K)
    out = jax.block_until_ready(out)

    # Reference check against plain JAX (same semantics as the PyTorch module).
    ref = jnp.mean(s.reshape(B, K, C, H, W), axis=1)
    assert out.shape == (B, C, H, W)
    assert jnp.allclose(out, ref, atol=1e-6, rtol=1e-6)

    print("KERNEL_OK")
</pallas_src>

<mosaic_0001>
module attributes {stable_mosaic.version = 11 : i64} {
  func.func @_mean_over_k_kernel(%arg0: i32, %arg1: i32, %arg2: memref<1x4x8x128xf32, #tpu.memory_space<vmem>>, %arg3: memref<1x8x128xf32, #tpu.memory_space<vmem>>) attributes {dimension_semantics = [#tpu.dimension_semantics<parallel>, #tpu.dimension_semantics<parallel>], iteration_bounds = array<i64: 2, 1>, scalar_prefetch = 0 : i64, scratch_operands = 0 : i64, tpu.core_type = #tpu.core_type<tc>, window_params = [{transform_indices = @transform_0, window_bounds = array<i64: 1, 4, 8, 128>}, {transform_indices = @transform_1, window_bounds = array<i64: 1, 8, 128>}]} {
    %c0 = arith.constant 0 : index
    %c0_0 = arith.constant 0 : index
    %c0_1 = arith.constant 0 : index
    %c0_2 = arith.constant 0 : index
    %0 = vector.load %arg2[%c0, %c0_0, %c0_1, %c0_2] : memref<1x4x8x128xf32, #tpu.memory_space<vmem>>, vector<1x4x8x128xf32>
    %1 = vector.shape_cast %0 : vector<1x4x8x128xf32> to vector<4x8x128xf32>
    %cst = arith.constant dense<0.000000e+00> : vector<8x128xf32>
    %2 = vector.multi_reduction <add>, %1, %cst [0] : vector<4x8x128xf32> to vector<8x128xf32>
    %cst_3 = arith.constant 2.500000e-01 : f32
    %3 = vector.broadcast %cst_3 : f32 to vector<8x128xf32>
    %4 = arith.mulf %2, %3 : vector<8x128xf32>
    %c0_4 = arith.constant 0 : index
    %c0_5 = arith.constant 0 : index
    %c0_6 = arith.constant 0 : index
    %5 = vector.load %arg3[%c0_4, %c0_5, %c0_6] : memref<1x8x128xf32, #tpu.memory_space<vmem>>, vector<1x8x128xf32>
    %6 = vector.shape_cast %5 : vector<1x8x128xf32> to vector<8x128xf32>
    %7 = vector.shape_cast %4 : vector<8x128xf32> to vector<1x8x128xf32>
    tpu.vector_store %arg3[%c0_4, %c0_5, %c0_6], %7 {strides = array<i32>} : memref<1x8x128xf32, #tpu.memory_space<vmem>>, vector<1x8x128xf32>,
    return
  }
  func.func @transform_0(%arg0: i32, %arg1: i32) -> (i32, i32, i32, i32) {
    %c0_i32 = arith.constant 0 : i32
    %c0_i32_0 = arith.constant 0 : i32
    %c0_i32_1 = arith.constant 0 : i32
    return %arg0, %c0_i32, %arg1, %c0_i32_0 : i32, i32, i32, i32
  }
  func.func @transform_1(%arg0: i32, %arg1: i32) -> (i32, i32, i32) {
    %c0_i32 = arith.constant 0 : i32
    %c0_i32_0 = arith.constant 0 : i32
    return %arg0, %arg1, %c0_i32 : i32, i32, i32
  }
}

</mosaic_0001>

<llo_original>
// kernel: tpu_custom_call.1
$region0: #{tpu_custom_call.1}
  #allocation0 [shape = 'u32[]', space=smem, size = 0x4, offset = 0x4, fixed_abs, tag = 'smem constant byte address 0x4 - core index']
  #allocation1 [shape = 'u32[144,128]{1,0:T(1,128)}', space=vmem, size = 0x12000, scoped, tag = 'internal scratch']
  %s0 = inlined_call_operand.hbm [shape: f32[2,4,8,128], index: 0, kind: input, shape index: {}]
  %s1 = inlined_call_operand.hbm [shape: f32[2,8,128], index: 1, kind: output, shape index: {}]
  %s2 = sld [smem:[#allocation0]]
  $region41: #{tpu_custom_call.1} parent=0
    _
  %s4 = ssub.s32 1, %s2
  %s5 = scalar_select 0, %s4, %s2
  $region1: #{tpu_custom_call.1} parent=0
    #allocation2 [shape = 'u8[32768]{0}', space=vmem, size = 0x8000, scoped, tag = 'input window, operand 0']
    #allocation3 [shape = 's32[2]{0}', space=sflag, size = 0x8, scoped, tag = 'scoped memory for tpu_custom_call.1']
    #allocation4 [shape = 's32[2]{0}', space=sflag, size = 0x8, scoped, tag = 'scoped memory for tpu_custom_call.1']
    #allocation5 [shape = 'u8[8192]{0}', space=vmem, size = 0x2000, scoped, tag = 'output window, operand 0']
    %6 = vsyncpa [#allocation3], 0
    %s7 = scalar_lea.sflag [#allocation3], 1
    %8 = vsyncpa %s7, 0
    %9 = vsyncpa [#allocation4], 0
    %s10 = scalar_lea.sflag [#allocation4], 1
    %11 = vsyncpa %s10, 0
    loop: start=0, step=1, limit=4
    $region2: #{tpu_custom_call.1} parent=1 // loop_pre_header
      _
    $region3: #{tpu_custom_call.1} parent=1 // loop_header
      %s13 = sphi 0, %s17
      %p14 = scmp.ge.s32.totalorder %s13, 4
      %s20 = sphi 0, %s32
      %s21 = sphi 0, %s28
      %s22 = sphi 0, %s20
      %s23 = sphi 0, %s21
      %s24 = sphi 0, %s22
      %s25 = sphi 0, %s23
      %s37 = sphi 0, %s39
      %s40 = sphi 0, %s37
      %s41 = sphi 0, %s40
      %s57 = sphi 0, %s41
      %s65 = sphi 0, %s67
      %s68 = sphi 0, %s65
      %s69 = sphi 0, %s68
      %s85 = sphi 0, %s69
    $region4: #{tpu_custom_call.1} parent=1 // loop_header_branch
      %16 = sbr.rel (%p14) target = $region8
    $region5: #{tpu_custom_call.1} parent=1 // loop_body
      %s18 = ssub.s32 %s13, 1
      %s19 = ssub.s32 %s13, 2
      %s26 = sadd.s32 1, %s21
      %p27 = scmp.ge.s32.totalorder %s26, 1
      %s28 = scalar_select %p27, 0, %s26
      %s29 = sadd.s32 1, %s20
      %s30 = scalar_select %p27, %s29, %s20
      %p31 = scmp.ge.s32.totalorder %s30, 2
      %s32 = scalar_select %p31, 0, %s30
      %s33 = ssub.s32 %s20, %s32
      %s34 = ssub.s32 %s21, %s28
      %s35 = sor.u32 %s33, %s34
      %p36 = scmp.eq.s32.totalorder %s35, 0
      %s38 = sadd.s32 %s37, 1
      %s39 = scalar_select %p36, %s37, %s38
      %p42 = pneg %p36
      %p43 = scmp.eq.s32.totalorder %s13, 1
      %p44 = por %p42, %p43
      %p45 = scmp.ne.s32.totalorder %s37, %s40
      %p46 = scmp.eq.s32.totalorder %s13, 0
      %p47 = por %p45, %p46
      %p48 = scmp.ne.s32.totalorder %s37, %s40
      %p49 = scmp.eq.s32.totalorder %s18, 1
      %p50 = por %p48, %p49
      %p51 = scmp.ne.s32.totalorder %s40, %s41
      %p52 = scmp.eq.s32.totalorder %s18, 0
      %p53 = por %p51, %p52
      %p54 = scmp.ne.s32.totalorder %s40, %s41
      %p55 = scmp.eq.s32.totalorder %s19, 1
      %p56 = por %p54, %p55
      %p58 = scmp.ne.s32.totalorder %s41, %s57
      %p59 = scmp.eq.s32.totalorder %s19, 0
      %p60 = por %p58, %p59
      %s61 = ssub.s32 %s20, %s32
      %s62 = ssub.s32 %s21, %s28
      %s63 = sor.u32 %s61, %s62
      %p64 = scmp.eq.s32.totalorder %s63, 0
      %s66 = sadd.s32 %s65, 1
      %s67 = scalar_select %p64, %s65, %s66
      %p70 = pneg %p64
      %p71 = scmp.eq.s32.totalorder %s13, 1
      %p72 = por %p70, %p71
      %p73 = scmp.ne.s32.totalorder %s65, %s68
      %p74 = scmp.eq.s32.totalorder %s13, 0
      %p75 = por %p73, %p74
      %p76 = scmp.ne.s32.totalorder %s65, %s68
      %p77 = scmp.eq.s32.totalorder %s18, 1
      %p78 = por %p76, %p77
      %p79 = scmp.ne.s32.totalorder %s68, %s69
      %p80 = scmp.eq.s32.totalorder %s18, 0
      %p81 = por %p79, %p80
      %p82 = scmp.ne.s32.totalorder %s68, %s69
      %p83 = scmp.eq.s32.totalorder %s19, 1
      %p84 = por %p82, %p83
      %p86 = scmp.ne.s32.totalorder %s69, %s85
      %p87 = scmp.eq.s32.totalorder %s19, 0
      %p88 = por %p86, %p87
      %p89 = scmp.le.s32.totalorder 1, %s13
      %p90 = scmp.lt.s32.totalorder %s13, 3
      %p91 = pnand %p89, %p90
      %p92 = pneg %p91
      // Predicated region
      $region9: #{tpu_custom_call.1} parent=5 // pred_check
        _
      $region10: #{tpu_custom_call.1} parent=5 // pred_check_branch
        %94 = sbr.rel (%p91) target = $region12
      $region11: #{tpu_custom_call.1} parent=5 // pred_region
        %s95 = ssub.s32 %s13, 1
      $region12: #{tpu_custom_call.1} parent=5 // pred_fallthru
        _
      %p96 = scmp.lt.s32.totalorder %s13, 2
      // Predicated region
      $region13: #{tpu_custom_call.1} parent=5 // pred_check
        %p97 = pneg %p96
      $region14: #{tpu_custom_call.1} parent=5 // pred_check_branch
        %99 = sbr.rel (%p97) target = $region16
      $region15: #{tpu_custom_call.1} parent=5 // pred_region
        // Predicated region
        $region17: #{tpu_custom_call.1} parent=15 // pred_check
          %p100 = pneg %p47
        $region18: #{tpu_custom_call.1} parent=15 // pred_check_branch
          %102 = sbr.rel (%p100) target = $region20
        $region19: #{tpu_custom_call.1} parent=15 // pred_region
          %s103 = sand.u32 %s37, 1
          %s104 = scalar_lea.sflag [#allocation3], %s103
          %s105 = sand.u32 %s37, 1
          %s106 = smul.addr %s105, 32
          %s107 = scalar_lea.vmem [#allocation2], %s106
          %s109 = ssub.s32 512, 512
          %110 = vsyncadd %s104, %s109
          %s111 = smul.addr %s20, 4
          %s112 = sadd.s32 %s21, %s111
          %s113 = smul.addr %s112, 128
          %s114 = scalar_lea.hbm %s0, %s113
          %s115 = sshll.u32 %s107, 4
          %s116 = int_to_ptr.vmem [resolvable:$true] %s115
          %121 = dma.hbm_to_vmem [thread:$0]  %s114, 512, %s116, %s104, 128, 128, 8
        $region20: #{tpu_custom_call.1} parent=15 // pred_fallthru
          _
      $region16: #{tpu_custom_call.1} parent=5 // pred_fallthru
        _
      %p122 = scmp.le.s32.totalorder 1, %s13
      %p123 = scmp.lt.s32.totalorder %s13, 3
      %p124 = pnand %p122, %p123
      %p125 = pneg %p124
      // Predicated region
      $region21: #{tpu_custom_call.1} parent=5 // pred_check
        _
      $region22: #{tpu_custom_call.1} parent=5 // pred_check_branch
        %127 = sbr.rel (%p124) target = $region24
      $region23: #{tpu_custom_call.1} parent=5 // pred_region
        %s128 = ssub.s32 %s13, 1
        %s129 = sand.u32 %s40, 1
        %s130 = scalar_lea.sflag [#allocation3], %s129
        %s131 = sand.u32 %s40, 1
        %s132 = smul.addr %s131, 32
        %s133 = scalar_lea.vmem [#allocation2], %s132
        // Predicated region
        $region25: #{tpu_custom_call.1} parent=23 // pred_check
          %p134 = pneg %p53
        $region26: #{tpu_custom_call.1} parent=23 // pred_check_branch
          %136 = sbr.rel (%p134) target = $region28
        $region27: #{tpu_custom_call.1} parent=23 // pred_region
          %137 = dma.done %s130, 512
        $region28: #{tpu_custom_call.1} parent=23 // pred_fallthru
          _
        %s138 = sand.u32 %s40, 1
        %s139 = scalar_lea.sflag [#allocation3], %s138
        %s140 = sand.u32 %s40, 1
        %s141 = smul.addr %s140, 32
        %s142 = scalar_lea.vmem [#allocation2], %s141
        %p143 = pneg %p53
        %p144 = pneg %p50
        %p145 = pneg %p81
        %p146 = pneg %p78
        %s147 = sand.u32 %s68, 1
        %s148 = scalar_lea.sflag [#allocation4], %s147
        %s149 = sand.u32 %s68, 1
        %s150 = smul.addr %s149, 8
        %s151 = scalar_lea.vmem [#allocation5], %s150
        %v152 = vld [vmem:[%s133] sm:$0xff]
        %v153 = vld [vmem:[%s133 + $0x8] sm:$0xff]
        %v154 = vld [vmem:[%s133 + $0x10] sm:$0xff]
        %v155 = vld [vmem:[%s133 + $0x18] sm:$0xff]
        %v156 = vadd.f32 %v152, %v153
        %v157 = vadd.f32 %v156, %v154
        %v158 = vadd.f32 %v157, %v155
        %v159 = vmul.f32 %v158, 0.25
        %160 = vst [vmem:[%s151] sm:$0xff] %v159
        %s161 = sand.u32 %s68, 1
        %s162 = scalar_lea.sflag [#allocation4], %s161
        %s163 = sand.u32 %s68, 1
        %s164 = smul.addr %s163, 8
        %s165 = scalar_lea.vmem [#allocation5], %s164
        // Predicated region
        $region29: #{tpu_custom_call.1} parent=23 // pred_check
          %p166 = pneg %p78
        $region30: #{tpu_custom_call.1} parent=23 // pred_check_branch
          %168 = sbr.rel (%p166) target = $region32
        $region31: #{tpu_custom_call.1} parent=23 // pred_region
          %s170 = ssub.s32 128, 128
          %171 = vsyncadd %s162, %s170
          %s172 = sadd.s32 %s23, %s22
          %s173 = smul.addr %s172, 128
          %s174 = scalar_lea.hbm %s1, %s173
          %s176 = sshll.u32 %s165, 4
          %s177 = int_to_ptr.vmem [resolvable:$true] %s176
          %179 = dma.vmem_to_hbm [thread:$0]  %s177, 128, %s174, %s162
        $region32: #{tpu_custom_call.1} parent=23 // pred_fallthru
          _
      $region24: #{tpu_custom_call.1} parent=5 // pred_fallthru
        _
      %p180 = scmp.le.s32.totalorder 2, %s13
      // Predicated region
      $region33: #{tpu_custom_call.1} parent=5 // pred_check
        %p181 = pneg %p180
      $region34: #{tpu_custom_call.1} parent=5 // pred_check_branch
        %183 = sbr.rel (%p181) target = $region36
      $region35: #{tpu_custom_call.1} parent=5 // pred_region
        %s184 = ssub.s32 %s13, 2
        // Predicated region
        $region37: #{tpu_custom_call.1} parent=35 // pred_check
          %p185 = pneg %p84
        $region38: #{tpu_custom_call.1} parent=35 // pred_check_branch
          %187 = sbr.rel (%p185) target = $region40
        $region39: #{tpu_custom_call.1} parent=35 // pred_region
          %s188 = sand.u32 %s69, 1
          %s189 = scalar_lea.sflag [#allocation4], %s188
          %s190 = sand.u32 %s69, 1
          %s191 = smul.addr %s190, 8
          %s192 = scalar_lea.vmem [#allocation5], %s191
          %193 = dma.done %s189, 128
        $region40: #{tpu_custom_call.1} parent=35 // pred_fallthru
          _
      $region36: #{tpu_custom_call.1} parent=5 // pred_fallthru
        _
    $region6: #{tpu_custom_call.1} parent=1 // loop_footer
      %s17 = sadd.s32 1, %s13
    $region7: #{tpu_custom_call.1} parent=1 // loop_footer_branch
      %12 = sbr.rel target = $region3
    $region8: #{tpu_custom_call.1} parent=1 // loop_exit
      _
    %194 = vsyncpa [#allocation3], 1
    %s195 = scalar_lea.sflag [#allocation3], 1
    %196 = vsyncpa %s195, 1
    %197 = vsyncpa [#allocation4], 1
    %s198 = scalar_lea.sflag [#allocation4], 1
    %199 = vsyncpa %s198, 1

</llo_original>
